<compile_context>
chip_gen: v7x
topology: tpu7x:2x2x1
jax: 0.10.0
libtpu: 0.0.40
codegen_flags: <defaults>
</compile_context>

<pallas_src>
import math
from functools import partial

import jax
import jax.numpy as jnp
from jax.experimental import pallas as pl
from jax.experimental.pallas import tpu as pltpu


def _round_up(x: int, m: int) -> int:
    return ((x + m - 1) // m) * m


def _token_embedding_kernel(scale, ids_ref, emb_ref, out_ref):
    # ids_ref: (TN, 1) int32   emb_ref: (Vp, Ep) f32   out_ref: (TN, Ep) f32
    ids = ids_ref[...]                                   # (TN, 1)
    tn = ids.shape[0]
    v_pad = emb_ref.shape[0]
    lane_iota = jax.lax.broadcasted_iota(jnp.int32, (tn, v_pad), 1)
    onehot = (lane_iota == ids).astype(emb_ref.dtype)    # (TN, Vp)
    emb = jnp.dot(onehot, emb_ref[...],
                  preferred_element_type=jnp.float32)    # (TN, Ep) on MXU
    out_ref[...] = emb * scale


def token_embedding(tokens, emb_table, *, tn=256):
    """tokens: int array of any shape; emb_table: (vocab, emb) f32."""
    vocab, emb_size = emb_table.shape
    scale = math.sqrt(emb_size)

    orig_shape = tokens.shape
    ids_flat = tokens.astype(jnp.int32).reshape(-1)
    n = ids_flat.shape[0]

    # Token tile: large enough to amortize per-grid-step overhead (~0.35 us),
    # multiple of 8 (f32 sublane), never larger than the 8-rounded token count.
    tn = max(8, min(_round_up(tn, 8), _round_up(n, 8)))
    assert tn % 8 == 0
    n_pad = _round_up(n, tn)

    # Lane-dense padding: both the one-hot lane dim (vocab, = MXU K) and the
    # output lane dim (emb) padded to multiples of 128.
    v_pad = _round_up(vocab, 128)
    e_pad = _round_up(emb_size, 128)

    ids_flat = jnp.pad(ids_flat, (0, n_pad - n)).reshape(n_pad, 1)
    table = emb_table.astype(jnp.float32)
    if (v_pad, e_pad) != (vocab, emb_size):
        table = jnp.pad(table, ((0, v_pad - vocab), (0, e_pad - emb_size)))

    # VMEM budget: double-buffered ids + table + output tiles, plus slack.
    vmem_bytes = 4 * (2 * tn * 1 + 2 * v_pad * e_pad + 2 * tn * e_pad)
    vmem_bytes = int(min(max(vmem_bytes + (4 << 20), 32 << 20), 64 << 20))

    out = pl.pallas_call(
        partial(_token_embedding_kernel, scale),
        out_shape=jax.ShapeDtypeStruct((n_pad, e_pad), jnp.float32),
        grid_spec=pltpu.PrefetchScalarGridSpec(
            num_scalar_prefetch=0,
            grid=(n_pad // tn,),
            in_specs=[
                pl.BlockSpec((tn, 1), lambda i: (i, 0)),         # token ids
                pl.BlockSpec((v_pad, e_pad), lambda i: (0, 0)),  # resident table
            ],
            out_specs=pl.BlockSpec((tn, e_pad), lambda i: (i, 0)),
        ),
        compiler_params=pltpu.CompilerParams(
            dimension_semantics=("parallel",),
            vmem_limit_bytes=vmem_bytes),
    )(ids_flat, table)

    # TODO(synk): for vocab*emb too large for VMEM, switch to a scalar-prefetch
    # DMA-gather variant (table in pl.ANY, per-row make_async_copy) instead of
    # the one-hot matmul.
    if n_pad != n:
        out = out[:n]
    if e_pad != emb_size:
        out = out[:, :emb_size]
    return out.reshape(*orig_shape, emb_size)


if __name__ == "__main__":
    vocab_size = 64
    emb_size = 32
    batch, seq = 2, 8

    key = jax.random.PRNGKey(0)
    k_emb, k_tok = jax.random.split(key)

    # nn.Embedding default init: weight ~ N(0, 1)
    emb_table = jax.random.normal(k_emb, (vocab_size, emb_size), dtype=jnp.float32)
    tokens = jax.random.randint(k_tok, (batch, seq), 0, vocab_size, dtype=jnp.int32)

    out = token_embedding(tokens, emb_table)
    out = jax.block_until_ready(out)

    # reference check (plain JAX gather * sqrt(emb_size))
    ref = jnp.take(emb_table, tokens, axis=0) * math.sqrt(emb_size)
    assert out.shape == (batch, seq, emb_size)
    assert jnp.allclose(out, ref, atol=1e-5, rtol=1e-5)

    print("KERNEL_OK")
</pallas_src>

<mosaic_0001>
module attributes {stable_mosaic.version = 11 : i64} {
  func.func @_token_embedding_kernel(%arg0: i32, %arg1: memref<16x1xi32, #tpu.memory_space<vmem>>, %arg2: memref<128x128xf32, #tpu.memory_space<vmem>>, %arg3: memref<16x128xf32, #tpu.memory_space<vmem>>) attributes {dimension_semantics = [#tpu.dimension_semantics<parallel>], iteration_bounds = array<i64: 1>, scalar_prefetch = 0 : i64, scratch_operands = 0 : i64, tpu.core_type = #tpu.core_type<tc>, window_params = [{transform_indices = @transform_0, window_bounds = array<i64: 16, 1>}, {pipeline_mode = #tpu.pipeline_mode<synchronous>, transform_indices = @transform_1, window_bounds = array<i64: 128, 128>}, {transform_indices = @transform_2, window_bounds = array<i64: 16, 128>}]} {
    %c0 = arith.constant 0 : index
    %c0_0 = arith.constant 0 : index
    %0 = vector.load %arg1[%c0, %c0_0] : memref<16x1xi32, #tpu.memory_space<vmem>>, vector<16x1xi32>
    %1 = tpu.iota {dimensions = array<i32: 1>} : vector<16x128xi32>
    %2 = vector.broadcast %0 : vector<16x1xi32> to vector<16x128xi32>
    %3 = arith.cmpi eq, %1, %2 : vector<16x128xi32>
    %4 = arith.extui %3 : vector<16x128xi1> to vector<16x128xi32>
    %5 = arith.sitofp %4 : vector<16x128xi32> to vector<16x128xf32>
    %c0_1 = arith.constant 0 : index
    %c0_2 = arith.constant 0 : index
    %6 = vector.load %arg2[%c0_1, %c0_2] : memref<128x128xf32, #tpu.memory_space<vmem>>, vector<128x128xf32>
    %cst = arith.constant dense<0.000000e+00> : vector<16x128xf32>
    %7 = tpu.matmul %5, %6, %cst {dimension_numbers = #tpu.dot_dimension_numbers<[1], [0], [0], [1], [0, 0, 1, 1], [], []>} : vector<16x128xf32>, vector<128x128xf32>, vector<16x128xf32> -> vector<16x128xf32>
    %cst_3 = arith.constant 5.65685415 : f32
    %8 = vector.broadcast %cst_3 : f32 to vector<16x128xf32>
    %9 = arith.mulf %7, %8 : vector<16x128xf32>
    %c0_4 = arith.constant 0 : index
    %c0_5 = arith.constant 0 : index
    %10 = vector.load %arg3[%c0_4, %c0_5] : memref<16x128xf32, #tpu.memory_space<vmem>>, vector<16x128xf32>
    tpu.vector_store %arg3[%c0_4, %c0_5], %9 {strides = array<i32>} : memref<16x128xf32, #tpu.memory_space<vmem>>, vector<16x128xf32>,
    return
  }
  func.func @transform_0(%arg0: i32) -> (i32, i32) {
    %c0_i32 = arith.constant 0 : i32
    %c0_i32_0 = arith.constant 0 : i32
    return %arg0, %c0_i32 : i32, i32
  }
  func.func @transform_1(%arg0: i32) -> (i32, i32) {
    %c0_i32 = arith.constant 0 : i32
    %c0_i32_0 = arith.constant 0 : i32
    %c0_i32_1 = arith.constant 0 : i32
    return %c0_i32, %c0_i32_0 : i32, i32
  }
  func.func @transform_2(%arg0: i32) -> (i32, i32) {
    %c0_i32 = arith.constant 0 : i32
    %c0_i32_0 = arith.constant 0 : i32
    return %arg0, %c0_i32 : i32, i32
  }
}

</mosaic_0001>

<llo_original>
// kernel: tpu_custom_call.1
$region0: #{tpu_custom_call.1}
  #allocation0 [shape = 'u32[]', space=smem, size = 0x4, offset = 0x4, fixed_abs, tag = 'smem constant byte address 0x4 - core index']
  #allocation1 [shape = 'u32[144,128]{1,0:T(1,128)}', space=vmem, size = 0x12000, scoped, tag = 'internal scratch']
  %s0 = inlined_call_operand.vmem [shape: s32[16,1], index: 0, kind: input, shape index: {}]
  %s1 = inlined_call_operand.hbm [shape: f32[128,128], index: 1, kind: input, shape index: {}]
  %s2 = inlined_call_operand.hbm [shape: f32[16,128], index: 2, kind: output, shape index: {}]
  %s3 = sld [smem:[#allocation0]]
  $region22: #{tpu_custom_call.1} parent=0
    _
  %s5 = ssub.s32 1, %s3
  %s6 = scalar_select 0, %s5, %s3
  $region1: #{tpu_custom_call.1} parent=0
    #allocation2 [shape = 'u8[65536]{0}', space=vmem, size = 0x10000, scoped, tag = 'input window, operand 1, single buffered']
    #allocation3 [shape = 's32[1]{0}', space=sflag, size = 0x4, scoped, tag = 'scoped memory for tpu_custom_call.1']
    #allocation4 [shape = 's32[1]{0}', space=sflag, size = 0x4, scoped, tag = 'scoped memory for tpu_custom_call.1']
    #allocation5 [shape = 'u8[8192]{0}', space=vmem, size = 0x2000, scoped, tag = 'output window, operand 0, single buffered']
    %7 = vsyncpa [#allocation3], 0
    %8 = vsyncpa [#allocation4], 0
    // Predicated region
    $region2: #{tpu_custom_call.1} parent=1 // pred_check
      _
    $region3: #{tpu_custom_call.1} parent=1 // pred_check_branch
      %10 = sbr.rel (0) target = $region5
    $region4: #{tpu_custom_call.1} parent=1 // pred_region
      _
    $region5: #{tpu_custom_call.1} parent=1 // pred_fallthru
      _
    // Predicated region
    $region6: #{tpu_custom_call.1} parent=1 // pred_check
      _
    $region7: #{tpu_custom_call.1} parent=1 // pred_check_branch
      %12 = sbr.rel (0) target = $region9
    $region8: #{tpu_custom_call.1} parent=1 // pred_region
      %s14 = ssub.s32 2048, 2048
      %15 = vsyncadd [#allocation3], %s14
      %s16 = sshll.u32 [#allocation2], 4
      %s17 = int_to_ptr.vmem [resolvable:$true] %s16
      %22 = dma.hbm_to_vmem [thread:$0]  %s1, 2048, %s17, [#allocation3], 128, 128, 8
    $region9: #{tpu_custom_call.1} parent=1 // pred_fallthru
      _
    // Predicated region
    $region10: #{tpu_custom_call.1} parent=1 // pred_check
      _
    $region11: #{tpu_custom_call.1} parent=1 // pred_check_branch
      %24 = sbr.rel (0) target = $region13
    $region12: #{tpu_custom_call.1} parent=1 // pred_region
      %25 = dma.done [#allocation3], 2048
    $region13: #{tpu_custom_call.1} parent=1 // pred_fallthru
      _
    %v26 = vld [vmem:[%s0] sm:$0xff]
    %v27 = vld [vmem:[%s0 + $0x8] sm:$0xff]
    %v28 = vlaneseq
    %v29 = vand.u32 %v28, 127
    %30 = vset.pattern.permute.xlu0 0
    %31 = vperm.xlu0 %30, %v26
    %v32 = vpop.permute.xlu0 %31
    %33 = vset.pattern.permute.xlu0 0
    %34 = vperm.xlu0 %33, %v27
    %v35 = vpop.permute.xlu0 %34
    %vm36 = vcmp.eq.s32.totalorder %v29, %v32
    %vm37 = vcmp.eq.s32.totalorder %v29, %v35
    %v38 = vsel %vm36, 1, 0
    %v39 = vsel %vm37, 1, 0
    %v40 = vcvt.s32.f32 %v38
    %v41 = vcvt.s32.f32 %v39
    %v42 = vld [vmem:[#allocation2] sm:$0xff]
    %v43 = vld [vmem:[#allocation2 + $0x8] sm:$0xff]
    %v44 = vld [vmem:[#allocation2 + $0x10] sm:$0xff]
    %v45 = vld [vmem:[#allocation2 + $0x18] sm:$0xff]
    %v46 = vld [vmem:[#allocation2 + $0x20] sm:$0xff]
    %v47 = vld [vmem:[#allocation2 + $0x28] sm:$0xff]
    %v48 = vld [vmem:[#allocation2 + $0x30] sm:$0xff]
    %v49 = vld [vmem:[#allocation2 + $0x38] sm:$0xff]
    %v50 = vld [vmem:[#allocation2 + $0x40] sm:$0xff]
    %v51 = vld [vmem:[#allocation2 + $0x48] sm:$0xff]
    %v52 = vld [vmem:[#allocation2 + $0x50] sm:$0xff]
    %v53 = vld [vmem:[#allocation2 + $0x58] sm:$0xff]
    %v54 = vld [vmem:[#allocation2 + $0x60] sm:$0xff]
    %v55 = vld [vmem:[#allocation2 + $0x68] sm:$0xff]
    %v56 = vld [vmem:[#allocation2 + $0x70] sm:$0xff]
    %v57 = vld [vmem:[#allocation2 + $0x78] sm:$0xff]
    %58 = vmatprep.subr.mxu0 0.0
    %59 = vmatpush1.msra.mxu0 %v42
    %60 = vmatprep.subr.mxu0 0.0
    %61 = vmatpush1.msra.mxu0 %v43
    %62 = vmatprep.subr.mxu0 0.0
    %63 = vmatpush1.msra.mxu0 %v44
    %64 = vmatprep.subr.mxu0 0.0
    %65 = vmatpush1.msra.mxu0 %v45
    %66 = vmatprep.subr.mxu0 0.0
    %67 = vmatpush1.msra.mxu0 %v46
    %68 = vmatprep.subr.mxu0 0.0
    %69 = vmatpush1.msra.mxu0 %v47
    %70 = vmatprep.subr.mxu0 0.0
    %71 = vmatpush1.msra.mxu0 %v48
    %72 = vmatprep.subr.mxu0 0.0
    %73 = vmatpush1.msra.mxu0 %v49
    %74 = vmatprep.subr.mxu0 0.0
    %75 = vmatpush1.msra.mxu0 %v50
    %76 = vmatprep.subr.mxu0 0.0
    %77 = vmatpush1.msra.mxu0 %v51
    %78 = vmatprep.subr.mxu0 0.0
    %79 = vmatpush1.msra.mxu0 %v52
    %80 = vmatprep.subr.mxu0 0.0
    %81 = vmatpush1.msra.mxu0 %v53
    %82 = vmatprep.subr.mxu0 0.0
    %83 = vmatpush1.msra.mxu0 %v54
    %84 = vmatprep.subr.mxu0 0.0
    %85 = vmatpush1.msra.mxu0 %v55
    %86 = vmatprep.subr.mxu0 0.0
    %87 = vmatpush1.msra.mxu0 %v56
    %88 = vmatprep.subr.mxu0 0.0
    %89 = vmatpush1.msra.mxu0 %v57
    %90 = vmatprep.subr.mxu0 0.0
    %91 = vmatpush1.msra.mxu0 0.0
    %92 = vmatprep.subr.mxu0 0.0
    %93 = vmatpush1.msra.mxu0 0.0
    %94 = vmatprep.subr.mxu0 0.0
    %95 = vmatpush1.msra.mxu0 0.0
    %96 = vmatprep.subr.mxu0 0.0
    %97 = vmatpush1.msra.mxu0 0.0
    %98 = vmatprep.subr.mxu0 0.0
    %99 = vmatpush1.msra.mxu0 0.0
    %100 = vmatprep.subr.mxu0 0.0
    %101 = vmatpush1.msra.mxu0 0.0
    %102 = vmatprep.subr.mxu0 0.0
    %103 = vmatpush1.msra.mxu0 0.0
    %104 = vmatprep.subr.mxu0 0.0
    %105 = vmatpush1.msra.mxu0 0.0
    %106 = vmatprep.subr.mxu0 0.0
    %107 = vmatpush1.msra.mxu0 0.0
    %108 = vmatprep.subr.mxu0 0.0
    %109 = vmatpush1.msra.mxu0 0.0
    %110 = vmatprep.subr.mxu0 0.0
    %111 = vmatpush1.msra.mxu0 0.0
    %112 = vmatprep.subr.mxu0 0.0
    %113 = vmatpush1.msra.mxu0 0.0
    %114 = vmatprep.subr.mxu0 0.0
    %115 = vmatpush1.msra.mxu0 0.0
    %116 = vmatprep.subr.mxu0 0.0
    %117 = vmatpush1.msra.mxu0 0.0
    %118 = vmatprep.subr.mxu0 0.0
    %119 = vmatpush1.msra.mxu0 0.0
    %120 = vmatprep.subr.mxu0 0.0
    %121 = vmatpush1.msra.mxu0 0.0
    %122 = vmatprep.mubr.f32.mxu0 0.0
    %123 = vmatmul.mubr.f32.gmra.mrb[0].mxu0 %v40
    %v124 = vpop.f32.mrb[0].mxu0
    %v125 = vadd.f32 0.0, %v124
    %v126 = vpop.f32.mrb[0].mxu0
    %127 = vmatprep.mubr.f32.mxu0 0.0
    %128 = vmatmul.mubr.f32.gmra.mrb[0].mxu0 %v41
    %v129 = vpop.f32.mrb[0].mxu0
    %v130 = vadd.f32 0.0, %v129
    %v131 = vpop.f32.mrb[0].mxu0
    %132 = vdwg.mxu0
    %v133 = vmul.f32 %v125, 5.656854
    %v134 = vmul.f32 %v130, 5.656854
    %135 = vst [vmem:[#allocation5] sm:$0xff] %v133
    %136 = vst [vmem:[#allocation5 + $0x8] sm:$0xff] %v134
    // Predicated region
    $region14: #{tpu_custom_call.1} parent=1 // pred_check
      _
    $region15: #{tpu_custom_call.1} parent=1 // pred_check_branch
      %138 = sbr.rel (0) target = $region17
    $region16: #{tpu_custom_call.1} parent=1 // pred_region
      %s140 = ssub.s32 256, 256
      %141 = vsyncadd [#allocation4], %s140
      %s142 = sshll.u32 [#allocation5], 4
      %s143 = int_to_ptr.vmem [resolvable:$true] %s142
      %148 = dma.vmem_to_hbm [thread:$0]  %s143, 256, %s2, [#allocation4], 128, 128, 8
    $region17: #{tpu_custom_call.1} parent=1 // pred_fallthru
      _
    // Predicated region
    $region18: #{tpu_custom_call.1} parent=1 // pred_check
      _
    $region19: #{tpu_custom_call.1} parent=1 // pred_check_branch
      %150 = sbr.rel (0) target = $region21
    $region20: #{tpu_custom_call.1} parent=1 // pred_region
      %151 = dma.done [#allocation4], 256
    $region21: #{tpu_custom_call.1} parent=1 // pred_fallthru
      _
    %152 = vsyncpa [#allocation3], 1
    %153 = vsyncpa [#allocation4], 1

</llo_original>
